<compile_context>
chip_gen: v5e
topology: v5e:2x2
jax: 0.10.0
libtpu: 0.0.40
codegen_flags: <defaults>
</compile_context>

<pallas_src>
import numpy as np
import jax
import jax.numpy as jnp
from jax.experimental import pallas as pl
from jax.experimental.pallas import tpu as pltpu

try:
    import ml_dtypes  # ships with jax
    _HOST_BF16 = np.dtype(ml_dtypes.bfloat16)
except Exception:  # pragma: no cover
    _HOST_BF16 = None


def _round_up(x: int, m: int) -> int:
    return ((x + m - 1) // m) * m


def _vmem_capacity_bytes() -> int:
    try:
        return int(pltpu.get_tpu_info().vmem_capacity_bytes)
    except Exception:
        return 64 << 20  # conservative: v7x per-TensorCore VMEM


def _vmem_limit(needed_bytes: int, capacity_bytes: int) -> int:
    # Never request the entire physical VMEM; leave >=16 MiB for compiler
    # scratch / pipelining headroom (48 MiB cap on a 64 MiB v7x core).
    cap = max(capacity_bytes - (16 << 20), 32 << 20)
    return int(min(max(needed_bytes + (8 << 20), 32 << 20), cap))


# ----------------------------------------------------------------------------
# Tiling / residency plan (generation-aware)
# ----------------------------------------------------------------------------
def make_plan(N: int, F: int, C: int):
    capacity = _vmem_capacity_bytes()
    big_vmem = capacity >= (96 << 20)        # v5e / v6e (128 MiB); v7x is 64 MiB

    # Node-axis tile (shared by both kernels).
    t_cap = 2048 if big_vmem else 1024
    if N <= 512:
        t = 256
    elif N <= 2048:
        t = 512
    elif N <= 8192:
        t = 1024
    else:
        t = t_cap
    # Keep >=2 row blocks when the graph is big enough so v7x's 2 TensorCores
    # both get work (row axis is the 'parallel' grid dimension).
    while t > 256 and _round_up(N, t) // t < 2:
        t //= 2
    NP = _round_up(N, t)

    CP = _round_up(max(C, 128), 128)         # lane-dense output width

    # Feature-axis (reduction) tile for the linear kernel.
    fk_cap = 2048 if big_vmem else 1024
    if F <= fk_cap:
        FP = _round_up(max(F, 128), 128)
        fk = FP
    else:
        FP = _round_up(F, fk_cap)
        fk = fk_cap

    # Keep H resident in the aggregation kernel when it fits comfortably.
    h_bytes = NP * CP * 2
    h_resident = (2 * h_bytes) <= max(16 << 20, capacity // 4)

    return dict(t=t, NP=NP, FP=FP, CP=CP, fk=fk,
                h_resident=h_resident, capacity=capacity)


# ----------------------------------------------------------------------------
# Kernel 1: feature transform  H = X @ W^T   (bf16 in, f32 acc, bf16 out)
# ----------------------------------------------------------------------------
def linear_kernel(x_ref, wt_ref, h_ref, acc_ref):
    k = pl.program_id(1)

    @pl.when(k == 0)
    def _():
        acc_ref[...] = jnp.zeros_like(acc_ref)

    acc_ref[...] += jnp.dot(x_ref[...], wt_ref[...],
                            preferred_element_type=jnp.float32)

    @pl.when(k == pl.num_programs(1) - 1)
    def _():
        h_ref[...] = acc_ref[...].astype(h_ref.dtype)


def linear_pallas(x_p, wt_p, *, tm, fk, capacity):
    NP, FP = x_p.shape
    CP = wt_p.shape[1]
    vmem_needed = (2 * tm * fk * 2 + 2 * fk * CP * 2
                   + 2 * tm * CP * 2 + tm * CP * 4)
    return pl.pallas_call(
        linear_kernel,
        out_shape=jax.ShapeDtypeStruct((NP, CP), jnp.bfloat16),
        grid_spec=pltpu.PrefetchScalarGridSpec(
            num_scalar_prefetch=0,
            grid=(NP // tm, FP // fk),                         # reduction last
            in_specs=[
                pl.BlockSpec((tm, fk), lambda i, k: (i, k)),   # X tile (bf16)
                pl.BlockSpec((fk, CP), lambda i, k: (k, 0)),   # W^T tile (bf16)
            ],
            out_specs=pl.BlockSpec((tm, CP), lambda i, k: (i, 0)),
            scratch_shapes=[pltpu.VMEM((tm, CP), jnp.float32)],
        ),
        compiler_params=pltpu.CompilerParams(
            dimension_semantics=("parallel", "arbitrary"),
            vmem_limit_bytes=_vmem_limit(vmem_needed, capacity),
        ),
        cost_estimate=pl.CostEstimate(
            flops=2 * NP * FP * CP,
            transcendentals=0,
            bytes_accessed=(NP * FP * 2 + (NP // tm) * FP * CP * 2
                            + NP * CP * 2),
        ),
    )(x_p, wt_p)


# ----------------------------------------------------------------------------
# Kernel 2: aggregation  OUT = A~ @ H + bias
#   - accumulates directly into the resident f32 output block
#   - H resident in VMEM (fetched once) when it fits, else K-tiled
# ----------------------------------------------------------------------------
def aggregate_kernel_tiled(a_ref, h_ref, b_ref, out_ref):
    k = pl.program_id(1)

    @pl.when(k == 0)
    def _():
        out_ref[...] = jnp.broadcast_to(b_ref[...], out_ref.shape)

    out_ref[...] += jnp.dot(a_ref[...], h_ref[...],
                            preferred_element_type=jnp.float32)


def aggregate_kernel_resident(a_ref, h_ref, b_ref, out_ref):
    k = pl.program_id(1)
    tk = a_ref.shape[1]

    @pl.when(k == 0)
    def _():
        out_ref[...] = jnp.broadcast_to(b_ref[...], out_ref.shape)

    start = pl.multiple_of(k * tk, tk)
    out_ref[...] += jnp.dot(a_ref[...], h_ref[pl.ds(start, tk), :],
                            preferred_element_type=jnp.float32)


def aggregate_pallas(a_p, h_p, b_p, *, tm, tk, h_resident, capacity):
    NP = a_p.shape[0]
    CP = h_p.shape[1]

    if h_resident:
        kernel = aggregate_kernel_resident
        h_spec = pl.BlockSpec((NP, CP), lambda i, k: (0, 0))   # fetched once
        h_vmem = 2 * NP * CP * 2
        h_hbm = NP * CP * 2
    else:
        kernel = aggregate_kernel_tiled
        h_spec = pl.BlockSpec((tk, CP), lambda i, k: (k, 0))
        h_vmem = 2 * tk * CP * 2
        h_hbm = (NP // tm) * NP * CP * 2                       # re-read / row blk

    vmem_needed = (2 * tm * tk * 2          # A~ tiles (bf16, double-buffered)
                   + h_vmem                 # H
                   + 2 * tm * CP * 4        # resident f32 output blocks
                   + 2 * 8 * CP * 4)        # bias (sublane-padded)

    # TODO(synk): for real sparse graphs replace this dense A~ @ H with a CSR /
    # scalar-prefetch gather kernel (row-ptr + col-idx in SMEM, manual DMA of H
    # rows, segment-sum) -> O(E*C) traffic instead of O(N^2*C).
    # TODO(synk): on v7x, storing A~ as fp8 (e4m3) would halve A bytes again.
    return pl.pallas_call(
        kernel,
        out_shape=jax.ShapeDtypeStruct((NP, CP), jnp.float32),
        grid_spec=pltpu.PrefetchScalarGridSpec(
            num_scalar_prefetch=0,
            grid=(NP // tm, NP // tk),                         # reduction last
            in_specs=[
                pl.BlockSpec((tm, tk), lambda i, k: (i, k)),   # A~ tile (bf16)
                h_spec,                                        # H
                pl.BlockSpec((1, CP), lambda i, k: (0, 0)),    # bias (lane-dense)
            ],
            out_specs=pl.BlockSpec((tm, CP), lambda i, k: (i, 0)),
        ),
        compiler_params=pltpu.CompilerParams(
            dimension_semantics=("parallel", "arbitrary"),
            vmem_limit_bytes=_vmem_limit(vmem_needed, capacity),
        ),
        cost_estimate=pl.CostEstimate(
            flops=2 * NP * NP * CP,
            transcendentals=0,
            bytes_accessed=NP * NP * 2 + h_hbm + NP * CP * 4 + CP * 4,
        ),
    )(a_p, h_p, b_p)


# ----------------------------------------------------------------------------
# Wrapper: padding + dispatch (A~ already padded/cast on the host, cacheable)
# ----------------------------------------------------------------------------
def gcn_forward_pallas(x, w, bias, a_p, plan):
    """x: [N,F] f32, w: [C,F] (torch Linear weight), bias: [C], a_p: [NP,NP] bf16."""
    N, F = x.shape
    C = w.shape[0]
    t, NP, FP, CP = plan["t"], plan["NP"], plan["FP"], plan["CP"]
    assert a_p.shape == (NP, NP)

    # Small O(N*F)/O(F*C) operands: zero-pad, lane-dense, bf16 for the MXU.
    x_p = jnp.zeros((NP, FP), jnp.bfloat16).at[:N, :F].set(x.astype(jnp.bfloat16))
    wt_p = jnp.zeros((FP, CP), jnp.bfloat16).at[:F, :C].set(
        jnp.transpose(w).astype(jnp.bfloat16))
    b_p = jnp.zeros((1, CP), jnp.float32).at[0, :C].set(bias.astype(jnp.float32))

    h_p = linear_pallas(x_p, wt_p, tm=t, fk=plan["fk"],
                        capacity=plan["capacity"])                 # [NP,CP] bf16
    out_p = aggregate_pallas(a_p, h_p, b_p, tm=t, tk=t,
                             h_resident=plan["h_resident"],
                             capacity=plan["capacity"])            # [NP,CP] f32
    return out_p[:N, :C]


# ----------------------------------------------------------------------------
# Graph glue (numpy, exact gcn_norm semantics of the PyTorch code)
# ----------------------------------------------------------------------------
def gcn_norm_dense(edge_index, edge_weight, num_nodes,
                   improved=False, add_self_loops=True):
    fill_value = 2.0 if improved else 1.0
    row = np.asarray(edge_index[0])
    col = np.asarray(edge_index[1])
    if edge_weight is None:
        edge_weight = np.ones(row.shape[0], dtype=np.float32)
    edge_weight = np.asarray(edge_weight, dtype=np.float32)

    if add_self_loops:
        # add_remaining_self_loops: drop existing self-loop edges, add one
        # self-loop per node (preserving a preexisting self-loop's weight).
        mask = row != col
        loop_w = np.full(num_nodes, fill_value, dtype=np.float32)
        inv = ~mask
        loop_w[row[inv]] = edge_weight[inv]
        loop_idx = np.arange(num_nodes)
        row = np.concatenate([row[mask], loop_idx])
        col = np.concatenate([col[mask], loop_idx])
        edge_weight = np.concatenate([edge_weight[mask], loop_w])

    deg = np.zeros(num_nodes, dtype=np.float32)
    np.add.at(deg, col, edge_weight)
    with np.errstate(divide="ignore"):
        deg_inv_sqrt = deg ** -0.5
    deg_inv_sqrt[np.isinf(deg_inv_sqrt)] = 0.0
    # NOTE: reproduces the reference exactly — deg_inv_sqrt[col] used twice.
    norm = deg_inv_sqrt[col] * edge_weight * deg_inv_sqrt[col]

    # Dense aggregation matrix: out[i] = sum_{(j->i)} norm * h[j] => A[i,j] += norm
    A = np.zeros((num_nodes, num_nodes), dtype=np.float32)
    np.add.at(A, (col, row), norm)
    return A


def pad_adjacency_bf16(a_dense_np, NP):
    """Host-side zero-pad + bf16 cast of A~ (do once, cache across forwards)."""
    N = a_dense_np.shape[0]
    if _HOST_BF16 is not None:
        a_p = np.zeros((NP, NP), dtype=_HOST_BF16)
        a_p[:N, :N] = np.asarray(a_dense_np, dtype=np.float32).astype(_HOST_BF16)
        return jnp.asarray(a_p)   # uploaded already in bf16, no device pad/cast
    # Fallback: single device-side pad + cast.
    return jnp.zeros((NP, NP), jnp.bfloat16).at[:N, :N].set(
        jnp.asarray(a_dense_np, jnp.bfloat16))


# ----------------------------------------------------------------------------
# Deterministic parameter init (matches shapes of GCNConv(nfeat, nclass))
# ----------------------------------------------------------------------------
def init_params(key, nfeat, nclass):
    # glorot uniform on weight [nclass, nfeat], zeros on bias
    stdv = np.sqrt(6.0 / (nfeat + nclass))
    w = jax.random.uniform(key, (nclass, nfeat), jnp.float32, -stdv, stdv)
    b = jnp.zeros((nclass,), jnp.float32)
    return w, b


if __name__ == "__main__":
    # Small synthetic graph consistent with StandGCN1 forward:
    #   x: [N, nfeat] node features, adj: edge_index [2, E]
    N, nfeat, nhid, nclass = 16, 32, 32, 8  # nhid unused (has_discriminator=False)

    key = jax.random.PRNGKey(0)
    kx, kw, ke = jax.random.split(key, 3)

    x = jax.random.normal(kx, (N, nfeat), jnp.float32)
    w, bias = init_params(kw, nfeat, nclass)

    # Deterministic undirected edge list without self loops.
    E = 24
    src = np.asarray(jax.random.randint(ke, (E,), 0, N))
    dst = (src + 1 + np.arange(E) % (N - 1)) % N
    edge_index = np.stack(
        [np.concatenate([src, dst]), np.concatenate([dst, src])], axis=0
    ).astype(np.int32)

    # gcn_norm (self loops + normalization, exact torch semantics), host side.
    a_dense = gcn_norm_dense(edge_index, None, N,
                             improved=False, add_self_loops=True)

    # Plan tiling / residency once, pad+cast A~ on the host once (cacheable).
    plan = make_plan(N, nfeat, nclass)
    a_p = pad_adjacency_bf16(a_dense, plan["NP"])

    # Pallas kernel forward (lane-dense padded, tiled, bf16 MXU operands).
    out = gcn_forward_pallas(x, w, bias, a_p, plan)
    out = jax.block_until_ready(out)

    # Pure-JAX f32 reference check (kernel uses bf16 A/H/X/W with f32
    # accumulation, so tolerance is loosened accordingly).
    ref = jnp.asarray(a_dense) @ (x @ w.T) + bias[None, :]
    np.testing.assert_allclose(np.asarray(out), np.asarray(ref),
                               rtol=2e-2, atol=2e-2)

    print("KERNEL_OK")
</pallas_src>

<mosaic_0001>
module attributes {stable_mosaic.version = 11 : i64} {
  func.func @linear_kernel(%arg0: i32, %arg1: i32, %arg2: memref<256x128xbf16, #tpu.memory_space<vmem>>, %arg3: memref<128x128xbf16, #tpu.memory_space<vmem>>, %arg4: memref<256x128xbf16, #tpu.memory_space<vmem>>, %arg5: memref<256x128xf32, #tpu.memory_space<vmem>>) attributes {dimension_semantics = [#tpu.dimension_semantics<parallel>, #tpu.dimension_semantics<arbitrary>], iteration_bounds = array<i64: 1, 1>, scalar_prefetch = 0 : i64, scratch_operands = 1 : i64, tpu.core_type = #tpu.core_type<tc>, window_params = [{transform_indices = @transform_0, window_bounds = array<i64: 256, 128>}, {transform_indices = @transform_1, window_bounds = array<i64: 128, 128>}, {transform_indices = @transform_2, window_bounds = array<i64: 256, 128>}]} {
    %c0_i32 = arith.constant 0 : i32
    %0 = arith.cmpi eq, %arg1, %c0_i32 : i32
    %1 = arith.extui %0 : i1 to i32
    %c0_i32_0 = arith.constant 0 : i32
    %2 = arith.cmpi ne, %1, %c0_i32_0 : i32
    scf.if %2 {
      %cst_10 = arith.constant 0.000000e+00 : f32
      %12 = vector.broadcast %cst_10 : f32 to vector<256x128xf32>
      %c0_11 = arith.constant 0 : index
      %c0_12 = arith.constant 0 : index
      %13 = vector.load %arg5[%c0_11, %c0_12] : memref<256x128xf32, #tpu.memory_space<vmem>>, vector<256x128xf32>
      tpu.vector_store %arg5[%c0_11, %c0_12], %12 {strides = array<i32>} : memref<256x128xf32, #tpu.memory_space<vmem>>, vector<256x128xf32>,
    } else {
    }
    %c0 = arith.constant 0 : index
    %c0_1 = arith.constant 0 : index
    %3 = vector.load %arg5[%c0, %c0_1] : memref<256x128xf32, #tpu.memory_space<vmem>>, vector<256x128xf32>
    %c0_2 = arith.constant 0 : index
    %c0_3 = arith.constant 0 : index
    %4 = vector.load %arg2[%c0_2, %c0_3] : memref<256x128xbf16, #tpu.memory_space<vmem>>, vector<256x128xbf16>
    %c0_4 = arith.constant 0 : index
    %c0_5 = arith.constant 0 : index
    %5 = vector.load %arg3[%c0_4, %c0_5] : memref<128x128xbf16, #tpu.memory_space<vmem>>, vector<128x128xbf16>
    %cst = arith.constant dense<0.000000e+00> : vector<256x128xf32>
    %6 = tpu.matmul %4, %5, %cst {dimension_numbers = #tpu.dot_dimension_numbers<[1], [0], [0], [1], [0, 0, 1, 1], [], []>} : vector<256x128xbf16>, vector<128x128xbf16>, vector<256x128xf32> -> vector<256x128xf32>
    %7 = arith.addf %3, %6 : vector<256x128xf32>
    %c0_6 = arith.constant 0 : index
    %c0_7 = arith.constant 0 : index
    %8 = vector.load %arg5[%c0_6, %c0_7] : memref<256x128xf32, #tpu.memory_space<vmem>>, vector<256x128xf32>
    tpu.vector_store %arg5[%c0_6, %c0_7], %7 {strides = array<i32>} : memref<256x128xf32, #tpu.memory_space<vmem>>, vector<256x128xf32>,
    %c0_i32_8 = arith.constant 0 : i32
    %9 = arith.cmpi eq, %arg1, %c0_i32_8 : i32
    %10 = arith.extui %9 : i1 to i32
    %c0_i32_9 = arith.constant 0 : i32
    %11 = arith.cmpi ne, %10, %c0_i32_9 : i32
    scf.if %11 {
      %c0_10 = arith.constant 0 : index
      %c0_11 = arith.constant 0 : index
      %12 = vector.load %arg5[%c0_10, %c0_11] : memref<256x128xf32, #tpu.memory_space<vmem>>, vector<256x128xf32>
      %13 = arith.truncf %12 : vector<256x128xf32> to vector<256x128xbf16>
      %c0_12 = arith.constant 0 : index
      %c0_13 = arith.constant 0 : index
      %14 = vector.load %arg4[%c0_12, %c0_13] : memref<256x128xbf16, #tpu.memory_space<vmem>>, vector<256x128xbf16>
      tpu.vector_store %arg4[%c0_12, %c0_13], %13 {strides = array<i32>} : memref<256x128xbf16, #tpu.memory_space<vmem>>, vector<256x128xbf16>,
    } else {
    }
    return
  }
  func.func @transform_0(%arg0: i32, %arg1: i32) -> (i32, i32) {
    %c0_i32 = arith.constant 0 : i32
    return %arg0, %arg1 : i32, i32
  }
  func.func @transform_1(%arg0: i32, %arg1: i32) -> (i32, i32) {
    %c0_i32 = arith.constant 0 : i32
    %c0_i32_0 = arith.constant 0 : i32
    return %arg1, %c0_i32 : i32, i32
  }
  func.func @transform_2(%arg0: i32, %arg1: i32) -> (i32, i32) {
    %c0_i32 = arith.constant 0 : i32
    %c0_i32_0 = arith.constant 0 : i32
    return %arg0, %c0_i32 : i32, i32
  }
}

</mosaic_0001>

<llo_original>
// kernel: tpu_custom_call.1
$region0: #{tpu_custom_call.1}
  #allocation0 [shape = 'u32[]', space=smem, size = 0x4, offset = 0x4, fixed_abs, tag = 'smem constant byte address 0x4 - core index']
  #allocation1 [shape = 'u32[72,128]{1,0:T(1,128)}', space=vmem, size = 0x9000, scoped, tag = 'internal scratch']
  #allocation2 [shape = 'f32[256,128]{1,0:T(8,128)}', space=vmem, size = 0x20000, scoped, tag = 'scratch operand']
  %s0 = inlined_call_operand.hbm [shape: bf16[256,128], index: 0, kind: input, shape index: {}]
  %s1 = inlined_call_operand.hbm [shape: bf16[128,128], index: 1, kind: input, shape index: {}]
  %s2 = inlined_call_operand.hbm [shape: bf16[256,128], index: 2, kind: output, shape index: {}]
  %s3 = sld [smem:[#allocation0]]
  $region34: #{tpu_custom_call.1} parent=0
    _
  %s5 = ssub.s32 1, %s3
  %s6 = scalar_select 0, %s5, %s3
  $region1: #{tpu_custom_call.1} parent=0
    #allocation3 [shape = 'u8[65536]{0}', space=vmem, size = 0x10000, scoped, tag = 'input window, operand 0, single buffered']
    #allocation4 [shape = 's32[1]{0}', space=sflag, size = 0x4, scoped, tag = 'scoped memory for tpu_custom_call.1']
    #allocation5 [shape = 's32[1]{0}', space=sflag, size = 0x4, scoped, tag = 'scoped memory for tpu_custom_call.1']
    #allocation6 [shape = 'u8[32768]{0}', space=vmem, size = 0x8000, scoped, tag = 'input window, operand 1, single buffered']
    #allocation7 [shape = 's32[1]{0}', space=sflag, size = 0x4, scoped, tag = 'scoped memory for tpu_custom_call.1']
    #allocation8 [shape = 'u8[65536]{0}', space=vmem, size = 0x10000, scoped, tag = 'output window, operand 0, single buffered']
    %7 = vsyncpa [#allocation4], 0
    %8 = vsyncpa [#allocation7], 0
    %9 = vsyncpa [#allocation5], 0
    // Predicated region
    $region2: #{tpu_custom_call.1} parent=1 // pred_check
      _
    $region3: #{tpu_custom_call.1} parent=1 // pred_check_branch
      %11 = sbr.rel (0) target = $region5
    $region4: #{tpu_custom_call.1} parent=1 // pred_region
      %13 = vsyncadd [#allocation4], 0
      %s14 = sshll.u32 %s0, 4
      %s15 = int_to_ptr.hbm [resolvable:$true] %s14
      %s16 = sshll.u32 [#allocation3], 4
      %s17 = int_to_ptr.vmem [resolvable:$true] %s16
      %22 = dma.hbm_to_vmem [thread:$0]  %s15, 2048, %s17, [#allocation4], 64, 64, 4
    $region5: #{tpu_custom_call.1} parent=1 // pred_fallthru
      _
    // Predicated region
    $region6: #{tpu_custom_call.1} parent=1 // pred_check
      _
    $region7: #{tpu_custom_call.1} parent=1 // pred_check_branch
      %24 = sbr.rel (0) target = $region9
    $region8: #{tpu_custom_call.1} parent=1 // pred_region
      %26 = vsyncadd [#allocation7], 0
      %s27 = sshll.u32 %s1, 4
      %s28 = int_to_ptr.hbm [resolvable:$true] %s27
      %s29 = sshll.u32 [#allocation6], 4
      %s30 = int_to_ptr.vmem [resolvable:$true] %s29
      %35 = dma.hbm_to_vmem [thread:$0]  %s28, 1024, %s30, [#allocation7], 64, 64, 4
    $region9: #{tpu_custom_call.1} parent=1 // pred_fallthru
      _
    // Predicated region
    $region10: #{tpu_custom_call.1} parent=1 // pred_check
      _
    $region11: #{tpu_custom_call.1} parent=1 // pred_check_branch
      %37 = sbr.rel (0) target = $region13
    $region12: #{tpu_custom_call.1} parent=1 // pred_region
      %39 = dma.done [#allocation4], 2048
    $region13: #{tpu_custom_call.1} parent=1 // pred_fallthru
      _
    // Predicated region
    $region14: #{tpu_custom_call.1} parent=1 // pred_check
      _
    $region15: #{tpu_custom_call.1} parent=1 // pred_check_branch
      %41 = sbr.rel (0) target = $region17
    $region16: #{tpu_custom_call.1} parent=1 // pred_region
      %43 = dma.done [#allocation7], 1024
    $region17: #{tpu_custom_call.1} parent=1 // pred_fallthru
      _
    %p44 = scmp.eq.s32.totalorder 0, 0
    // Predicated region
    $region18: #{tpu_custom_call.1} parent=1 // pred_check
      %p45 = pneg %p44
    $region19: #{tpu_custom_call.1} parent=1 // pred_check_branch
      %47 = sbr.rel (%p45) target = $region21
    $region20: #{tpu_custom_call.1} parent=1 // pred_region
      %48 = vst [vmem:[#allocation2] sm:$0xff] 0.0
      %49 = vst [vmem:[#allocation2 + $0x8] sm:$0xff] 0.0
      %50 = vst [vmem:[#allocation2 + $0x10] sm:$0xff] 0.0
      %51 = vst [vmem:[#allocation2 + $0x18] sm:$0xff] 0.0
      %52 = vst [vmem:[#allocation2 + $0x20] sm:$0xff] 0.0
      %53 = vst [vmem:[#allocation2 + $0x28] sm:$0xff] 0.0
      %54 = vst [vmem:[#allocation2 + $0x30] sm:$0xff] 0.0
      %55 = vst [vmem:[#allocation2 + $0x38] sm:$0xff] 0.0
      %56 = vst [vmem:[#allocation2 + $0x40] sm:$0xff] 0.0
      %57 = vst [vmem:[#allocation2 + $0x48] sm:$0xff] 0.0
      %58 = vst [vmem:[#allocation2 + $0x50] sm:$0xff] 0.0
      %59 = vst [vmem:[#allocation2 + $0x58] sm:$0xff] 0.0
      %60 = vst [vmem:[#allocation2 + $0x60] sm:$0xff] 0.0
      %61 = vst [vmem:[#allocation2 + $0x68] sm:$0xff] 0.0
      %62 = vst [vmem:[#allocation2 + $0x70] sm:$0xff] 0.0
      %63 = vst [vmem:[#allocation2 + $0x78] sm:$0xff] 0.0
      %64 = vst [vmem:[#allocation2 + $0x80] sm:$0xff] 0.0
      %65 = vst [vmem:[#allocation2 + $0x88] sm:$0xff] 0.0
      %66 = vst [vmem:[#allocation2 + $0x90] sm:$0xff] 0.0
      %67 = vst [vmem:[#allocation2 + $0x98] sm:$0xff] 0.0
      %68 = vst [vmem:[#allocation2 + $0xa0] sm:$0xff] 0.0
      %69 = vst [vmem:[#allocation2 + $0xa8] sm:$0xff] 0.0
      %70 = vst [vmem:[#allocation2 + $0xb0] sm:$0xff] 0.0
      %71 = vst [vmem:[#allocation2 + $0xb8] sm:$0xff] 0.0
      %72 = vst [vmem:[#allocation2 + $0xc0] sm:$0xff] 0.0
      %73 = vst [vmem:[#allocation2 + $0xc8] sm:$0xff] 0.0
      %74 = vst [vmem:[#allocation2 + $0xd0] sm:$0xff] 0.0
      %75 = vst [vmem:[#allocation2 + $0xd8] sm:$0xff] 0.0
      %76 = vst [vmem:[#allocation2 + $0xe0] sm:$0xff] 0.0
      %77 = vst [vmem:[#allocation2 + $0xe8] sm:$0xff] 0.0
      %78 = vst [vmem:[#allocation2 + $0xf0] sm:$0xff] 0.0
      %79 = vst [vmem:[#allocation2 + $0xf8] sm:$0xff] 0.0
    $region21: #{tpu_custom_call.1} parent=1 // pred_fallthru
      _
    %v80 = vld [vmem:[#allocation2] sm:$0xff]
    %v81 = vld [vmem:[#allocation2 + $0x8] sm:$0xff]
    %v82 = vld [vmem:[#allocation2 + $0x10] sm:$0xff]
    %v83 = vld [vmem:[#allocation2 + $0x18] sm:$0xff]
    %v84 = vld [vmem:[#allocation2 + $0x20] sm:$0xff]
    %v85 = vld [vmem:[#allocation2 + $0x28] sm:$0xff]
    %v86 = vld [vmem:[#allocation2 + $0x30] sm:$0xff]
    %v87 = vld [vmem:[#allocation2 + $0x38] sm:$0xff]
    %v88 = vld [vmem:[#allocation2 + $0x40] sm:$0xff]
    %v89 = vld [vmem:[#allocation2 + $0x48] sm:$0xff]
    %v90 = vld [vmem:[#allocation2 + $0x50] sm:$0xff]
    %v91 = vld [vmem:[#allocation2 + $0x58] sm:$0xff]
    %v92 = vld [vmem:[#allocation2 + $0x60] sm:$0xff]
    %v93 = vld [vmem:[#allocation2 + $0x68] sm:$0xff]
    %v94 = vld [vmem:[#allocation2 + $0x70] sm:$0xff]
    %v95 = vld [vmem:[#allocation2 + $0x78] sm:$0xff]
    %v96 = vld [vmem:[#allocation2 + $0x80] sm:$0xff]
    %v97 = vld [vmem:[#allocation2 + $0x88] sm:$0xff]
    %v98 = vld [vmem:[#allocation2 + $0x90] sm:$0xff]
    %v99 = vld [vmem:[#allocation2 + $0x98] sm:$0xff]
    %v100 = vld [vmem:[#allocation2 + $0xa0] sm:$0xff]
    %v101 = vld [vmem:[#allocation2 + $0xa8] sm:$0xff]
    %v102 = vld [vmem:[#allocation2 + $0xb0] sm:$0xff]
    %v103 = vld [vmem:[#allocation2 + $0xb8] sm:$0xff]
    %v104 = vld [vmem:[#allocation2 + $0xc0] sm:$0xff]
    %v105 = vld [vmem:[#allocation2 + $0xc8] sm:$0xff]
    %v106 = vld [vmem:[#allocation2 + $0xd0] sm:$0xff]
    %v107 = vld [vmem:[#allocation2 + $0xd8] sm:$0xff]
    %v108 = vld [vmem:[#allocation2 + $0xe0] sm:$0xff]
    %v109 = vld [vmem:[#allocation2 + $0xe8] sm:$0xff]
    %v110 = vld [vmem:[#allocation2 + $0xf0] sm:$0xff]
    %v111 = vld [vmem:[#allocation2 + $0xf8] sm:$0xff]
    %v112 = vld [vmem:[#allocation3] sm:$0xf]
    %v113 = vld [vmem:[#allocation3 + $0x4] sm:$0xf]
    %v114 = vld [vmem:[#allocation3 + $0x8] sm:$0xf]
    %v115 = vld [vmem:[#allocation3 + $0xc] sm:$0xf]
    %v116 = vld [vmem:[#allocation3 + $0x10] sm:$0xf]
    %v117 = vld [vmem:[#allocation3 + $0x14] sm:$0xf]
    %v118 = vld [vmem:[#allocation3 + $0x18] sm:$0xf]
    %v119 = vld [vmem:[#allocation3 + $0x1c] sm:$0xf]
    %v120 = vld [vmem:[#allocation3 + $0x20] sm:$0xf]
    %v121 = vld [vmem:[#allocation3 + $0x24] sm:$0xf]
    %v122 = vld [vmem:[#allocation3 + $0x28] sm:$0xf]
    %v123 = vld [vmem:[#allocation3 + $0x2c] sm:$0xf]
    %v124 = vld [vmem:[#allocation3 + $0x30] sm:$0xf]
    %v125 = vld [vmem:[#allocation3 + $0x34] sm:$0xf]
    %v126 = vld [vmem:[#allocation3 + $0x38] sm:$0xf]
    %v127 = vld [vmem:[#allocation3 + $0x3c] sm:$0xf]
    %v128 = vld [vmem:[#allocation3 + $0x40] sm:$0xf]
    %v129 = vld [vmem:[#allocation3 + $0x44] sm:$0xf]
    %v130 = vld [vmem:[#allocation3 + $0x48] sm:$0xf]
    %v131 = vld [vmem:[#allocation3 + $0x4c] sm:$0xf]
    %v132 = vld [vmem:[#allocation3 + $0x50] sm:$0xf]
    %v133 = vld [vmem:[#allocation3 + $0x54] sm:$0xf]
    %v134 = vld [vmem:[#allocation3 + $0x58] sm:$0xf]
    %v135 = vld [vmem:[#allocation3 + $0x5c] sm:$0xf]
    %v136 = vld [vmem:[#allocation3 + $0x60] sm:$0xf]
    %v137 = vld [vmem:[#allocation3 + $0x64] sm:$0xf]
    %v138 = vld [vmem:[#allocation3 + $0x68] sm:$0xf]
    %v139 = vld [vmem:[#allocation3 + $0x6c] sm:$0xf]
    %v140 = vld [vmem:[#allocation3 + $0x70] sm:$0xf]
    %v141 = vld [vmem:[#allocation3 + $0x74] sm:$0xf]
    %v142 = vld [vmem:[#allocation3 + $0x78] sm:$0xf]
    %v143 = vld [vmem:[#allocation3 + $0x7c] sm:$0xf]
    %v144 = vld [vmem:[#allocation6] sm:$0xf]
    %v145 = vld [vmem:[#allocation6 + $0x4] sm:$0xf]
    %v146 = vld [vmem:[#allocation6 + $0x8] sm:$0xf]
    %v147 = vld [vmem:[#allocation6 + $0xc] sm:$0xf]
    %v148 = vld [vmem:[#allocation6 + $0x10] sm:$0xf]
    %v149 = vld [vmem:[#allocation6 + $0x14] sm:$0xf]
    %v150 = vld [vmem:[#allocation6 + $0x18] sm:$0xf]
    %v151 = vld [vmem:[#allocation6 + $0x1c] sm:$0xf]
    %v152 = vld [vmem:[#allocation6 + $0x20] sm:$0xf]
    %v153 = vld [vmem:[#allocation6 + $0x24] sm:$0xf]
    %v154 = vld [vmem:[#allocation6 + $0x28] sm:$0xf]
    %v155 = vld [vmem:[#allocation6 + $0x2c] sm:$0xf]
    %v156 = vld [vmem:[#allocation6 + $0x30] sm:$0xf]
    %v157 = vld [vmem:[#allocation6 + $0x34] sm:$0xf]
    %v158 = vld [vmem:[#allocation6 + $0x38] sm:$0xf]
    %v159 = vld [vmem:[#allocation6 + $0x3c] sm:$0xf]
    %v192 = vunpack.c.l.b16 %v112
    %v193 = vunpack.c.l.b16 %v113
    %v194 = vunpack.c.l.b16 %v114
    %v195 = vunpack.c.l.b16 %v115
    %v196 = vunpack.c.l.b16 %v116
    %v197 = vunpack.c.l.b16 %v117
    %v198 = vunpack.c.l.b16 %v118
    %v199 = vunpack.c.l.b16 %v119
    %v200 = vunpack.c.l.b16 %v120
    %v201 = vunpack.c.l.b16 %v121
    %v202 = vunpack.c.l.b16 %v122
    %v203 = vunpack.c.l.b16 %v123
    %v204 = vunpack.c.l.b16 %v124
    %v205 = vunpack.c.l.b16 %v125
    %v206 = vunpack.c.l.b16 %v126
    %v207 = vunpack.c.l.b16 %v127
    %v208 = vunpack.c.l.b16 %v128
    %v209 = vunpack.c.l.b16 %v129
    %v210 = vunpack.c.l.b16 %v130
    %v211 = vunpack.c.l.b16 %v131
    %v212 = vunpack.c.l.b16 %v132
    %v213 = vunpack.c.l.b16 %v133
    %v214 = vunpack.c.l.b16 %v134
    %v215 = vunpack.c.l.b16 %v135
    %v216 = vunpack.c.l.b16 %v136
    %v217 = vunpack.c.l.b16 %v137
    %v218 = vunpack.c.l.b16 %v138
    %v219 = vunpack.c.l.b16 %v139
    %v220 = vunpack.c.l.b16 %v140
    %v221 = vunpack.c.l.b16 %v141
    %v222 = vunpack.c.l.b16 %v142
    %v223 = vunpack.c.l.b16 %v143
    %v224 = vpack.c.b16 %v193, %v192
    %v225 = vpack.c.b16 %v195, %v194
    %v226 = vpack.c.b16 %v197, %v196
    %v227 = vpack.c.b16 %v199, %v198
    %v228 = vpack.c.b16 %v201, %v200
    %v229 = vpack.c.b16 %v203, %v202
    %v230 = vpack.c.b16 %v205, %v204
    %v231 = vpack.c.b16 %v207, %v206
    %v232 = vpack.c.b16 %v209, %v208
    %v233 = vpack.c.b16 %v211, %v210
    %v234 = vpack.c.b16 %v213, %v212
    %v235 = vpack.c.b16 %v215, %v214
    %v236 = vpack.c.b16 %v217, %v216
    %v237 = vpack.c.b16 %v219, %v218
    %v238 = vpack.c.b16 %v221, %v220
    %v239 = vpack.c.b16 %v223, %v222
    %v272 = vunpack.c.l.b16 %v144
    %v273 = vunpack.c.l.b16 %v145
    %v274 = vunpack.c.l.b16 %v146
    %v275 = vunpack.c.l.b16 %v147
    %v276 = vunpack.c.l.b16 %v148
    %v277 = vunpack.c.l.b16 %v149
    %v278 = vunpack.c.l.b16 %v150
    %v279 = vunpack.c.l.b16 %v151
    %v280 = vunpack.c.l.b16 %v152
    %v281 = vunpack.c.l.b16 %v153
    %v282 = vunpack.c.l.b16 %v154
    %v283 = vunpack.c.l.b16 %v155
    %v284 = vunpack.c.l.b16 %v156
    %v285 = vunpack.c.l.b16 %v157
    %v286 = vunpack.c.l.b16 %v158
    %v287 = vunpack.c.l.b16 %v159
    %v288 = vpack.c.b16 %v273, %v272
    %v289 = vpack.c.b16 %v275, %v274
    %v290 = vpack.c.b16 %v277, %v276
    %v291 = vpack.c.b16 %v279, %v278
    %v292 = vpack.c.b16 %v281, %v280
    %v293 = vpack.c.b16 %v283, %v282
    %v294 = vpack.c.b16 %v285, %v284
    %v295 = vpack.c.b16 %v287, %v286
    %304 = vmatpush.bf16.msra.mxu0 %v295
    %305 = vmatpush.bf16.msra.mxu0 %v294
    %306 = vmatpush.bf16.msra.mxu0 %v293
    %307 = vmatpush.bf16.msra.mxu0 %v292
    %308 = vmatpush.bf16.msra.mxu0 %v291
    %309 = vmatpush.bf16.msra.mxu0 %v290
    %310 = vmatpush.bf16.msra.mxu0 %v289
    %311 = vmatpush.bf16.msra.mxu0 %v288
    %312 = vmatmul.bf16.gmra.mxu0 %v224
    %v313 = vpop.f32.mrf.mxu0
    %v314 = vadd.f32 0.0, %v313
    %v315 = vpop.f32.mrf.mxu0
    %v316 = vadd.f32 0.0, %v315
    %317 = vmatmul.bf16.gmra.mxu0 %v225
    %v318 = vpop.f32.mrf.mxu0
    %v319 = vadd.f32 0.0, %v318
    %v320 = vpop.f32.mrf.mxu0
    %v321 = vadd.f32 0.0, %v320
    %322 = vmatmul.bf16.gmra.mxu0 %v226
    %v323 = vpop.f32.mrf.mxu0
    %v324 = vadd.f32 0.0, %v323
    %v325 = vpop.f32.mrf.mxu0
    %v326 = vadd.f32 0.0, %v325
    %327 = vmatmul.bf16.gmra.mxu0 %v227
    %v328 = vpop.f32.mrf.mxu0
    %v329 = vadd.f32 0.0, %v328
    %v330 = vpop.f32.mrf.mxu0
    %v331 = vadd.f32 0.0, %v330
    %332 = vmatmul.bf16.gmra.mxu0 %v228
    %v333 = vpop.f32.mrf.mxu0
    %v334 = vadd.f32 0.0, %v333
    %v335 = vpop.f32.mrf.mxu0
    %v336 = vadd.f32 0.0, %v335
    %337 = vmatmul.bf16.gmra.mxu0 %v229
    %v338 = vpop.f32.mrf.mxu0
    %v339 = vadd.f32 0.0, %v338
    %v340 = vpop.f32.mrf.mxu0
    %v341 = vadd.f32 0.0, %v340
    %342 = vmatmul.bf16.gmra.mxu0 %v230
    %v343 = vpop.f32.mrf.mxu0
    %v344 = vadd.f32 0.0, %v343
    %v345 = vpop.f32.mrf.mxu0
    %v346 = vadd.f32 0.0, %v345
    %347 = vmatmul.bf16.gmra.mxu0 %v231
    %v348 = vpop.f32.mrf.mxu0
    %v349 = vadd.f32 0.0, %v348
    %v350 = vpop.f32.mrf.mxu0
    %v351 = vadd.f32 0.0, %v350
    %352 = vmatmul.bf16.gmra.mxu0 %v232
    %v353 = vpop.f32.mrf.mxu0
    %v354 = vadd.f32 0.0, %v353
    %v355 = vpop.f32.mrf.mxu0
    %v356 = vadd.f32 0.0, %v355
    %357 = vmatmul.bf16.gmra.mxu0 %v233
    %v358 = vpop.f32.mrf.mxu0
    %v359 = vadd.f32 0.0, %v358
    %v360 = vpop.f32.mrf.mxu0
    %v361 = vadd.f32 0.0, %v360
    %362 = vmatmul.bf16.gmra.mxu0 %v234
    %v363 = vpop.f32.mrf.mxu0
    %v364 = vadd.f32 0.0, %v363
    %v365 = vpop.f32.mrf.mxu0
    %v366 = vadd.f32 0.0, %v365
    %367 = vmatmul.bf16.gmra.mxu0 %v235
    %v368 = vpop.f32.mrf.mxu0
    %v369 = vadd.f32 0.0, %v368
    %v370 = vpop.f32.mrf.mxu0
    %v371 = vadd.f32 0.0, %v370
    %372 = vmatmul.bf16.gmra.mxu0 %v236
    %v373 = vpop.f32.mrf.mxu0
    %v374 = vadd.f32 0.0, %v373
    %v375 = vpop.f32.mrf.mxu0
    %v376 = vadd.f32 0.0, %v375
    %377 = vmatmul.bf16.gmra.mxu0 %v237
    %v378 = vpop.f32.mrf.mxu0
    %v379 = vadd.f32 0.0, %v378
    %v380 = vpop.f32.mrf.mxu0
    %v381 = vadd.f32 0.0, %v380
    %382 = vmatmul.bf16.gmra.mxu0 %v238
    %v383 = vpop.f32.mrf.mxu0
    %v384 = vadd.f32 0.0, %v383
    %v385 = vpop.f32.mrf.mxu0
    %v386 = vadd.f32 0.0, %v385
    %387 = vmatmul.bf16.gmra.mxu0 %v239
    %v388 = vpop.f32.mrf.mxu0
    %v389 = vadd.f32 0.0, %v388
    %v390 = vpop.f32.mrf.mxu0
    %v391 = vadd.f32 0.0, %v390
    %392 = vdwg.mxu0
    %v393 = vadd.f32 %v80, %v314
    %v394 = vadd.f32 %v81, %v316
    %v395 = vadd.f32 %v82, %v319
    %v396 = vadd.f32 %v83, %v321
    %v397 = vadd.f32 %v84, %v324
    %v398 = vadd.f32 %v85, %v326
    %v399 = vadd.f32 %v86, %v329
    %v400 = vadd.f32 %v87, %v331
    %v401 = vadd.f32 %v88, %v334
    %v402 = vadd.f32 %v89, %v336
    %v403 = vadd.f32 %v90, %v339
    %v404 = vadd.f32 %v91, %v341
    %v405 = vadd.f32 %v92, %v344
    %v406 = vadd.f32 %v93, %v346
    %v407 = vadd.f32 %v94, %v349
    %v408 = vadd.f32 %v95, %v351
    %v409 = vadd.f32 %v96, %v354
    %v410 = vadd.f32 %v97, %v356
    %v411 = vadd.f32 %v98, %v359
    %v412 = vadd.f32 %v99, %v361
    %v413 = vadd.f32 %v100, %v364
    %v414 = vadd.f32 %v101, %v366
    %v415 = vadd.f32 %v102, %v369
    %v416 = vadd.f32 %v103, %v371
    %v417 = vadd.f32 %v104, %v374
    %v418 = vadd.f32 %v105, %v376
    %v419 = vadd.f32 %v106, %v379
    %v420 = vadd.f32 %v107, %v381
    %v421 = vadd.f32 %v108, %v384
    %v422 = vadd.f32 %v109, %v386
    %v423 = vadd.f32 %v110, %v389
    %v424 = vadd.f32 %v111, %v391
    %425 = vst [vmem:[#allocation2] sm:$0xff] %v393
    %426 = vst [vmem:[#allocation2 + $0x8] sm:$0xff] %v394
    %427 = vst [vmem:[#allocation2 + $0x10] sm:$0xff] %v395
    %428 = vst [vmem:[#allocation2 + $0x18] sm:$0xff] %v396
    %429 = vst [vmem:[#allocation2 + $0x20] sm:$0xff] %v397
    %430 = vst [vmem:[#allocation2 + $0x28] sm:$0xff] %v398
    %431 = vst [vmem:[#allocation2 + $0x30] sm:$0xff] %v399
    %432 = vst [vmem:[#allocation2 + $0x38] sm:$0xff] %v400
    %433 = vst [vmem:[#allocation2 + $0x40] sm:$0xff] %v401
    %434 = vst [vmem:[#allocation2 + $0x48] sm:$0xff] %v402
    %435 = vst [vmem:[#allocation2 + $0x50] sm:$0xff] %v403
    %436 = vst [vmem:[#allocation2 + $0x58] sm:$0xff] %v404
    %437 = vst [vmem:[#allocation2 + $0x60] sm:$0xff] %v405
    %438 = vst [vmem:[#allocation2 + $0x68] sm:$0xff] %v406
    %439 = vst [vmem:[#allocation2 + $0x70] sm:$0xff] %v407
    %440 = vst [vmem:[#allocation2 + $0x78] sm:$0xff] %v408
    %441 = vst [vmem:[#allocation2 + $0x80] sm:$0xff] %v409
    %442 = vst [vmem:[#allocation2 + $0x88] sm:$0xff] %v410
    %443 = vst [vmem:[#allocation2 + $0x90] sm:$0xff] %v411
    %444 = vst [vmem:[#allocation2 + $0x98] sm:$0xff] %v412
    %445 = vst [vmem:[#allocation2 + $0xa0] sm:$0xff] %v413
    %446 = vst [vmem:[#allocation2 + $0xa8] sm:$0xff] %v414
    %447 = vst [vmem:[#allocation2 + $0xb0] sm:$0xff] %v415
    %448 = vst [vmem:[#allocation2 + $0xb8] sm:$0xff] %v416
    %449 = vst [vmem:[#allocation2 + $0xc0] sm:$0xff] %v417
    %450 = vst [vmem:[#allocation2 + $0xc8] sm:$0xff] %v418
    %451 = vst [vmem:[#allocation2 + $0xd0] sm:$0xff] %v419
    %452 = vst [vmem:[#allocation2 + $0xd8] sm:$0xff] %v420
    %453 = vst [vmem:[#allocation2 + $0xe0] sm:$0xff] %v421
    %454 = vst [vmem:[#allocation2 + $0xe8] sm:$0xff] %v422
    %455 = vst [vmem:[#allocation2 + $0xf0] sm:$0xff] %v423
    %456 = vst [vmem:[#allocation2 + $0xf8] sm:$0xff] %v424
    // Predicated region
    $region22: #{tpu_custom_call.1} parent=1 // pred_check
      %p457 = pneg %p44
    $region23: #{tpu_custom_call.1} parent=1 // pred_check_branch
      %459 = sbr.rel (%p457) target = $region25
    $region24: #{tpu_custom_call.1} parent=1 // pred_region
      %v460 = vld [vmem:[#allocation2] sm:$0xff]
      %v461 = vld [vmem:[#allocation2 + $0x8] sm:$0xff]
      %v462 = vld [vmem:[#allocation2 + $0x10] sm:$0xff]
      %v463 = vld [vmem:[#allocation2 + $0x18] sm:$0xff]
      %v464 = vld [vmem:[#allocation2 + $0x20] sm:$0xff]
      %v465 = vld [vmem:[#allocation2 + $0x28] sm:$0xff]
      %v466 = vld [vmem:[#allocation2 + $0x30] sm:$0xff]
      %v467 = vld [vmem:[#allocation2 + $0x38] sm:$0xff]
      %v468 = vld [vmem:[#allocation2 + $0x40] sm:$0xff]
      %v469 = vld [vmem:[#allocation2 + $0x48] sm:$0xff]
      %v470 = vld [vmem:[#allocation2 + $0x50] sm:$0xff]
      %v471 = vld [vmem:[#allocation2 + $0x58] sm:$0xff]
      %v472 = vld [vmem:[#allocation2 + $0x60] sm:$0xff]
      %v473 = vld [vmem:[#allocation2 + $0x68] sm:$0xff]
      %v474 = vld [vmem:[#allocation2 + $0x70] sm:$0xff]
      %v475 = vld [vmem:[#allocation2 + $0x78] sm:$0xff]
      %v476 = vld [vmem:[#allocation2 + $0x80] sm:$0xff]
      %v477 = vld [vmem:[#allocation2 + $0x88] sm:$0xff]
      %v478 = vld [vmem:[#allocation2 + $0x90] sm:$0xff]
      %v479 = vld [vmem:[#allocation2 + $0x98] sm:$0xff]
      %v480 = vld [vmem:[#allocation2 + $0xa0] sm:$0xff]
      %v481 = vld [vmem:[#allocation2 + $0xa8] sm:$0xff]
      %v482 = vld [vmem:[#allocation2 + $0xb0] sm:$0xff]
      %v483 = vld [vmem:[#allocation2 + $0xb8] sm:$0xff]
      %v484 = vld [vmem:[#allocation2 + $0xc0] sm:$0xff]
      %v485 = vld [vmem:[#allocation2 + $0xc8] sm:$0xff]
      %v486 = vld [vmem:[#allocation2 + $0xd0] sm:$0xff]
      %v487 = vld [vmem:[#allocation2 + $0xd8] sm:$0xff]
      %v488 = vld [vmem:[#allocation2 + $0xe0] sm:$0xff]
      %v489 = vld [vmem:[#allocation2 + $0xe8] sm:$0xff]
      %v490 = vld [vmem:[#allocation2 + $0xf0] sm:$0xff]
      %v491 = vld [vmem:[#allocation2 + $0xf8] sm:$0xff]
      %v492 = vpack.c.bf16 %v460, %v460
      %v493 = vpack.c.bf16 %v461, %v461
      %v494 = vpack.c.bf16 %v462, %v462
      %v495 = vpack.c.bf16 %v463, %v463
      %v496 = vpack.c.bf16 %v464, %v464
      %v497 = vpack.c.bf16 %v465, %v465
      %v498 = vpack.c.bf16 %v466, %v466
      %v499 = vpack.c.bf16 %v467, %v467
      %v500 = vpack.c.bf16 %v468, %v468
      %v501 = vpack.c.bf16 %v469, %v469
      %v502 = vpack.c.bf16 %v470, %v470
      %v503 = vpack.c.bf16 %v471, %v471
      %v504 = vpack.c.bf16 %v472, %v472
      %v505 = vpack.c.bf16 %v473, %v473
      %v506 = vpack.c.bf16 %v474, %v474
      %v507 = vpack.c.bf16 %v475, %v475
      %v508 = vpack.c.bf16 %v476, %v476
      %v509 = vpack.c.bf16 %v477, %v477
      %v510 = vpack.c.bf16 %v478, %v478
      %v511 = vpack.c.bf16 %v479, %v479
      %v512 = vpack.c.bf16 %v480, %v480
      %v513 = vpack.c.bf16 %v481, %v481
      %v514 = vpack.c.bf16 %v482, %v482
      %v515 = vpack.c.bf16 %v483, %v483
      %v516 = vpack.c.bf16 %v484, %v484
      %v517 = vpack.c.bf16 %v485, %v485
      %v518 = vpack.c.bf16 %v486, %v486
      %v519 = vpack.c.bf16 %v487, %v487
      %v520 = vpack.c.bf16 %v488, %v488
      %v521 = vpack.c.bf16 %v489, %v489
      %v522 = vpack.c.bf16 %v490, %v490
      %v523 = vpack.c.bf16 %v491, %v491
      %524 = vst [vmem:[#allocation8] sm:$0xf] %v492
      %525 = vst [vmem:[#allocation8 + $0x4] sm:$0xf] %v493
      %526 = vst [vmem:[#allocation8 + $0x8] sm:$0xf] %v494
      %527 = vst [vmem:[#allocation8 + $0xc] sm:$0xf] %v495
      %528 = vst [vmem:[#allocation8 + $0x10] sm:$0xf] %v496
      %529 = vst [vmem:[#allocation8 + $0x14] sm:$0xf] %v497
      %530 = vst [vmem:[#allocation8 + $0x18] sm:$0xf] %v498
      %531 = vst [vmem:[#allocation8 + $0x1c] sm:$0xf] %v499
      %532 = vst [vmem:[#allocation8 + $0x20] sm:$0xf] %v500
      %533 = vst [vmem:[#allocation8 + $0x24] sm:$0xf] %v501
      %534 = vst [vmem:[#allocation8 + $0x28] sm:$0xf] %v502
      %535 = vst [vmem:[#allocation8 + $0x2c] sm:$0xf] %v503
      %536 = vst [vmem:[#allocation8 + $0x30] sm:$0xf] %v504
      %537 = vst [vmem:[#allocation8 + $0x34] sm:$0xf] %v505
      %538 = vst [vmem:[#allocation8 + $0x38] sm:$0xf] %v506
      %539 = vst [vmem:[#allocation8 + $0x3c] sm:$0xf] %v507
      %540 = vst [vmem:[#allocation8 + $0x40] sm:$0xf] %v508
      %541 = vst [vmem:[#allocation8 + $0x44] sm:$0xf] %v509
      %542 = vst [vmem:[#allocation8 + $0x48] sm:$0xf] %v510
      %543 = vst [vmem:[#allocation8 + $0x4c] sm:$0xf] %v511
      %544 = vst [vmem:[#allocation8 + $0x50] sm:$0xf] %v512
      %545 = vst [vmem:[#allocation8 + $0x54] sm:$0xf] %v513
      %546 = vst [vmem:[#allocation8 + $0x58] sm:$0xf] %v514
      %547 = vst [vmem:[#allocation8 + $0x5c] sm:$0xf] %v515
      %548 = vst [vmem:[#allocation8 + $0x60] sm:$0xf] %v516
      %549 = vst [vmem:[#allocation8 + $0x64] sm:$0xf] %v517
      %550 = vst [vmem:[#allocation8 + $0x68] sm:$0xf] %v518
      %551 = vst [vmem:[#allocation8 + $0x6c] sm:$0xf] %v519
      %552 = vst [vmem:[#allocation8 + $0x70] sm:$0xf] %v520
      %553 = vst [vmem:[#allocation8 + $0x74] sm:$0xf] %v521
      %554 = vst [vmem:[#allocation8 + $0x78] sm:$0xf] %v522
      %555 = vst [vmem:[#allocation8 + $0x7c] sm:$0xf] %v523
    $region25: #{tpu_custom_call.1} parent=1 // pred_fallthru
      _
    // Predicated region
    $region26: #{tpu_custom_call.1} parent=1 // pred_check
      _
    $region27: #{tpu_custom_call.1} parent=1 // pred_check_branch
      %557 = sbr.rel (0) target = $region29
    $region28: #{tpu_custom_call.1} parent=1 // pred_region
      %559 = vsyncadd [#allocation5], 0
      %s560 = sshll.u32 [#allocation8], 4
      %s561 = int_to_ptr.vmem [resolvable:$true] %s560
      %s562 = sshll.u32 %s2, 4
      %s563 = int_to_ptr.hbm [resolvable:$true] %s562
      %568 = dma.vmem_to_hbm [thread:$0]  %s561, 2048, %s563, [#allocation5], 64, 64, 4
    $region29: #{tpu_custom_call.1} parent=1 // pred_fallthru
      _
    // Predicated region
    $region30: #{tpu_custom_call.1} parent=1 // pred_check
      _
    $region31: #{tpu_custom_call.1} parent=1 // pred_check_branch
      %570 = sbr.rel (0) target = $region33
    $region32: #{tpu_custom_call.1} parent=1 // pred_region
      %572 = dma.done [#allocation5], 2048
    $region33: #{tpu_custom_call.1} parent=1 // pred_fallthru
      _
    %573 = vsyncpa [#allocation4], 1
    %574 = vsyncpa [#allocation7], 1
    %575 = vsyncpa [#allocation5], 1

</llo_original>
